<compile_context>
chip_gen: v7x
topology: tpu7x:2x2x1
jax: 0.10.0
libtpu: 0.0.40
codegen_flags: <defaults>
</compile_context>

<pallas_src>
from functools import partial

import jax
import jax.numpy as jnp
import numpy as np
from jax.experimental import pallas as pl
from jax.experimental.pallas import tpu as pltpu

H1S = 256   # fcs1 width
H1A = 128   # fca1 width
H2 = 128    # fcs2 / fc2 width


def _round_up(x, m):
    return ((x + m - 1) // m) * m


# ----------------------------- Pallas kernel -------------------------------
def critic_kernel(sa_ref, w1_ref, b1_ref,
                  w_s2_ref, b_s2_ref,
                  w_f2s_ref, w_f2a_ref, b_f2_ref,
                  w_f3_ref, b_f3_ref,
                  out_ref):
    f32 = jnp.float32
    mxu = w1_ref.dtype

    # Stage 1 (fused fcs1 + fca1): ONE MXU pass with a block-diagonal weight
    #   [s1 | a1] = relu([state|action] @ [[W_fcs1, 0], [0, W_fca1]] + [b_s1|b_a1])
    # K = state_dim+action_dim (~40); Mosaic zero-pads the odd K internally.
    h1 = jnp.dot(sa_ref[...], w1_ref[...], preferred_element_type=f32)
    h1 = jnp.maximum(h1 + b1_ref[...], 0.0)
    s1 = h1[:, :H1S]          # (TILE_B, 256) f32
    a1 = h1[:, H1S:]          # (TILE_B, 128) f32

    # fc2 "action half": a1 @ W_f2_a — independent of stage 2, so the MXU can
    # start it before / alongside the fcs2 GEMM.
    xa = jnp.dot(a1.astype(mxu), w_f2a_ref[...], preferred_element_type=f32)

    # Stage 2: s2 = relu(s1 @ W_fcs2 + b_fcs2)   (TILE_B, 128)
    s2 = jnp.dot(s1.astype(mxu), w_s2_ref[...], preferred_element_type=f32)
    s2 = jnp.maximum(s2 + b_s2_ref[...], 0.0)

    # Stage 3: x = relu(s2 @ W_f2_s + a1 @ W_f2_a + b_fc2)  — replaces the old
    # cat(s2, a1) scratch round-trip with accumulating dots.
    xs = jnp.dot(s2.astype(mxu), w_f2s_ref[...], preferred_element_type=f32)
    x = jnp.maximum(xs + xa + b_f2_ref[...], 0.0)

    # Stage 4: fc3 as VPU multiply + lane reduction (no N=1 MXU pass).
    # Result is written lane-dense: batch along the lane axis of a (1,1,tile_b)
    # output row.  (The (tile_b,) -> lane relayout rides the XLU slot.)
    q = jnp.sum(x * w_f3_ref[...], axis=-1) + b_f3_ref[0, 0]   # (TILE_B,)
    out_ref[0, 0, :] = q.astype(out_ref.dtype)


# ------------------------------ wrapper ------------------------------------
def pack_critic_params(params, state_dim, action_dim, mxu_dtype=jnp.bfloat16):
    """Pack per-layer params into the fused / MXU-friendly layout (call once)."""
    sa_dim = state_dim + action_dim
    k_pad = _round_up(max(sa_dim, 8), 8)       # stage-1 K, kept small (no 128 pad)

    # Block-diagonal stage-1 weight: (k_pad, 384) = [[W_fcs1, 0], [0, W_fca1]]
    w1 = jnp.zeros((k_pad, H1S + H1A), jnp.float32)
    w1 = w1.at[:state_dim, :H1S].set(params["fcs1_w"])
    w1 = w1.at[state_dim:sa_dim, H1S:].set(params["fca1_w"])
    b1 = jnp.concatenate([params["fcs1_b"], params["fca1_b"]], axis=1)  # (1, 384)

    return {
        "w1":    w1.astype(mxu_dtype),
        "b1":    b1.astype(jnp.float32),
        "w_s2":  params["fcs2_w"].astype(mxu_dtype),
        "b_s2":  params["fcs2_b"].astype(jnp.float32),
        # fc2 split into the s2 half (rows 0:128) and the a1 half (rows 128:256)
        "w_f2s": params["fc2_w"][:H2].astype(mxu_dtype),
        "w_f2a": params["fc2_w"][H2:].astype(mxu_dtype),
        "b_f2":  params["fc2_b"].astype(jnp.float32),
        "w_f3":  params["fc3_w"].reshape(1, -1).astype(jnp.float32),   # (1, 128)
        "b_f3":  params["fc3_b"].reshape(1, 1).astype(jnp.float32),    # (1, 1) SMEM
    }


@partial(jax.jit, static_argnames=("tile_b_cap",))
def critic_forward(state, action, packed, *, tile_b_cap=2048):
    B = state.shape[0]
    k_pad = packed["w1"].shape[0]
    h1w = packed["w1"].shape[1]            # 384
    mxu_dtype = packed["w1"].dtype

    # One cheap wrapper pass: concat state|action and cast to the MXU dtype.
    # No padding to 128 lanes (Mosaic zero-pads the dot's K internally).
    sa = jnp.concatenate([state, action], axis=1).astype(mxu_dtype)
    if sa.shape[1] < k_pad:
        sa = jnp.pad(sa, ((0, 0), (0, k_pad - sa.shape[1])))

    # Batch tiling.  Keep >= 2 grid steps when B is large enough so the
    # "parallel" batch axis actually spans both v7x TensorCores.
    if B <= 8:
        tile_b = _round_up(max(B, 1), 8)
    else:
        tile_b = min(tile_b_cap, _round_up(pl.cdiv(B, 2), 8))
    num_tiles = pl.cdiv(B, tile_b)

    batch_map = lambda i: (i, 0)
    const_map = lambda i: (0, 0)

    in_specs = [
        pl.BlockSpec((tile_b, k_pad), batch_map),          # sa   (streamed)
        pl.BlockSpec((k_pad, h1w),    const_map),          # w1   (resident)
        pl.BlockSpec((1, h1w),        const_map),          # b1
        pl.BlockSpec((H1S, H2),       const_map),          # w_fcs2
        pl.BlockSpec((1, H2),         const_map),          # b_fcs2
        pl.BlockSpec((H2, H2),        const_map),          # w_fc2 (s2 half)
        pl.BlockSpec((H1A, H2),       const_map),          # w_fc2 (a1 half)
        pl.BlockSpec((1, H2),         const_map),          # b_fc2
        pl.BlockSpec((1, H2),         const_map),          # w_fc3 row
        pl.BlockSpec(memory_space=pltpu.MemorySpace.SMEM), # b_fc3 scalar
    ]

    flops = int(2 * B * (k_pad * h1w + H1S * H2 + H2 * H2 + H1A * H2 + H2))
    bytes_accessed = int(
        sa.size * sa.dtype.itemsize
        + num_tiles * tile_b * 4
        + sum(int(np.prod(v.shape)) * v.dtype.itemsize for v in packed.values())
    )

    # NOTE: when B is not a multiple of tile_b, the last block computes on
    # out-of-bounds (unspecified) input rows; those output lanes are sliced
    # off below — never read out rows >= B from the kernel output directly.
    out = pl.pallas_call(
        critic_kernel,
        out_shape=jax.ShapeDtypeStruct((num_tiles, 1, tile_b), jnp.float32),
        grid=(num_tiles,),
        in_specs=in_specs,
        out_specs=pl.BlockSpec((1, 1, tile_b), lambda i: (i, 0, 0)),
        compiler_params=pltpu.CompilerParams(
            dimension_semantics=("parallel",),
            vmem_limit_bytes=32 * 1024 * 1024),
        cost_estimate=pl.CostEstimate(flops=flops, transcendentals=0,
                                      bytes_accessed=bytes_accessed),
    )(sa, packed["w1"], packed["b1"],
      packed["w_s2"], packed["b_s2"],
      packed["w_f2s"], packed["w_f2a"], packed["b_f2"],
      packed["w_f3"], packed["b_f3"])

    # Lane-dense (num_tiles, 1, tile_b) -> (B, 1); flat index i*tile_b+j == batch.
    return out.reshape(-1)[:B].reshape(B, 1)


# --------------------------- parameter init --------------------------------
def init_critic_params(key, state_dim, action_dim, eps=0.003):
    """Deterministic init matching the shapes / init ranges of Critic.__init__.

    normalize_weight uses uniform(-1/sqrt(out_features), +1/sqrt(out_features))
    (size[0] of a torch Linear weight is out_features).  Biases use the default
    nn.Linear range 1/sqrt(in_features).  Weights are stored transposed as
    (in_features, out_features); biases are (1, out_features).
    """
    def linear(key, in_f, out_f, w_range, b_range):
        kw, kb = jax.random.split(key)
        w = jax.random.uniform(kw, (in_f, out_f), jnp.float32, -w_range, w_range)
        b = jax.random.uniform(kb, (1, out_f), jnp.float32, -b_range, b_range)
        return w, b

    k1, k2, k3, k4, k5 = jax.random.split(key, 5)
    p = {}
    p["fcs1_w"], p["fcs1_b"] = linear(k1, state_dim, H1S,
                                      1.0 / np.sqrt(H1S), 1.0 / np.sqrt(state_dim))
    p["fcs2_w"], p["fcs2_b"] = linear(k2, H1S, H2,
                                      1.0 / np.sqrt(H2), 1.0 / np.sqrt(H1S))
    p["fca1_w"], p["fca1_b"] = linear(k3, action_dim, H1A,
                                      1.0 / np.sqrt(H1A), 1.0 / np.sqrt(action_dim))
    p["fc2_w"], p["fc2_b"] = linear(k4, H1S, H2,
                                    1.0 / np.sqrt(H2), 1.0 / np.sqrt(H1S))
    p["fc3_w"], p["fc3_b"] = linear(k5, H2, 1, eps, 1.0 / np.sqrt(H2))
    return p


# ----------------------------- reference -----------------------------------
def critic_reference(state, action, params):
    """Pure f32 reference matching the PyTorch module semantics."""
    s1 = jax.nn.relu(state @ params["fcs1_w"] + params["fcs1_b"])
    s2 = jax.nn.relu(s1 @ params["fcs2_w"] + params["fcs2_b"])
    a1 = jax.nn.relu(action @ params["fca1_w"] + params["fca1_b"])
    x = jnp.concatenate([s2, a1], axis=1)
    x = jax.nn.relu(x @ params["fc2_w"] + params["fc2_b"])
    return x @ params["fc3_w"] + params["fc3_b"]


# -------------------------------- main --------------------------------------
if __name__ == "__main__":
    B, STATE_DIM, ACTION_DIM = 8, 32, 8

    key = jax.random.PRNGKey(0)
    k_params, k_state, k_action = jax.random.split(key, 3)

    params = init_critic_params(k_params, STATE_DIM, ACTION_DIM)
    packed = pack_critic_params(params, STATE_DIM, ACTION_DIM)

    state = jax.random.normal(k_state, (B, STATE_DIM), jnp.float32)
    action = jax.random.normal(k_action, (B, ACTION_DIM), jnp.float32)

    q = critic_forward(state, action, packed)
    q = jax.block_until_ready(q)

    q_ref = critic_reference(state, action, params)
    # Kernel runs matmuls in bf16 (inputs + weights) with f32 accumulation ->
    # loose tolerance against the pure-f32 reference.
    np.testing.assert_allclose(np.asarray(q), np.asarray(q_ref),
                               rtol=3e-2, atol=3e-2)

    print("KERNEL_OK")
</pallas_src>

<mosaic_0001>
module attributes {stable_mosaic.version = 11 : i64} {
  func.func @critic_kernel(%arg0: i32, %arg1: memref<8x40xbf16, #tpu.memory_space<vmem>>, %arg2: memref<40x384xbf16, #tpu.memory_space<vmem>>, %arg3: memref<1x384xf32, #tpu.memory_space<vmem>>, %arg4: memref<256x128xbf16, #tpu.memory_space<vmem>>, %arg5: memref<1x128xf32, #tpu.memory_space<vmem>>, %arg6: memref<128x128xbf16, #tpu.memory_space<vmem>>, %arg7: memref<128x128xbf16, #tpu.memory_space<vmem>>, %arg8: memref<1x128xf32, #tpu.memory_space<vmem>>, %arg9: memref<1x128xf32, #tpu.memory_space<vmem>>, %arg10: memref<1x1xf32, #tpu.memory_space<smem>>, %arg11: memref<1x1x8xf32, #tpu.memory_space<vmem>>) attributes {dimension_semantics = [#tpu.dimension_semantics<parallel>], iteration_bounds = array<i64: 1>, scalar_prefetch = 0 : i64, scratch_operands = 0 : i64, tpu.core_type = #tpu.core_type<tc>, window_params = [{transform_indices = @transform_0, window_bounds = array<i64: 8, 40>}, {pipeline_mode = #tpu.pipeline_mode<synchronous>, transform_indices = @transform_1, window_bounds = array<i64: 40, 384>}, {pipeline_mode = #tpu.pipeline_mode<synchronous>, transform_indices = @transform_2, window_bounds = array<i64: 1, 384>}, {pipeline_mode = #tpu.pipeline_mode<synchronous>, transform_indices = @transform_3, window_bounds = array<i64: 256, 128>}, {pipeline_mode = #tpu.pipeline_mode<synchronous>, transform_indices = @transform_4, window_bounds = array<i64: 1, 128>}, {pipeline_mode = #tpu.pipeline_mode<synchronous>, transform_indices = @transform_5, window_bounds = array<i64: 128, 128>}, {pipeline_mode = #tpu.pipeline_mode<synchronous>, transform_indices = @transform_6, window_bounds = array<i64: 128, 128>}, {pipeline_mode = #tpu.pipeline_mode<synchronous>, transform_indices = @transform_7, window_bounds = array<i64: 1, 128>}, {pipeline_mode = #tpu.pipeline_mode<synchronous>, transform_indices = @transform_8, window_bounds = array<i64: 1, 128>}, {transform_indices = @transform_9, window_bounds = array<i64: 1, 1>}, {transform_indices = @transform_10, window_bounds = array<i64: 1, 1, 8>}]} {
    %c0 = arith.constant 0 : index
    %c0_0 = arith.constant 0 : index
    %0 = vector.load %arg1[%c0, %c0_0] : memref<8x40xbf16, #tpu.memory_space<vmem>>, vector<8x40xbf16>
    %c0_1 = arith.constant 0 : index
    %c0_2 = arith.constant 0 : index
    %1 = vector.load %arg2[%c0_1, %c0_2] : memref<40x384xbf16, #tpu.memory_space<vmem>>, vector<40x384xbf16>
    %cst = arith.constant dense<0.000000e+00> : vector<8x384xf32>
    %2 = tpu.matmul %0, %1, %cst {dimension_numbers = #tpu.dot_dimension_numbers<[1], [0], [0], [1], [0, 0, 1, 1], [], []>} : vector<8x40xbf16>, vector<40x384xbf16>, vector<8x384xf32> -> vector<8x384xf32>
    %c0_3 = arith.constant 0 : index
    %c0_4 = arith.constant 0 : index
    %3 = vector.load %arg3[%c0_3, %c0_4] : memref<1x384xf32, #tpu.memory_space<vmem>>, vector<1x384xf32>
    %4 = vector.broadcast %3 : vector<1x384xf32> to vector<8x384xf32>
    %5 = arith.addf %2, %4 : vector<8x384xf32>
    %cst_5 = arith.constant 0.000000e+00 : f32
    %6 = vector.broadcast %cst_5 : f32 to vector<8x384xf32>
    %7 = arith.maximumf %5, %6 : vector<8x384xf32>
    %8 = vector.extract_strided_slice %7 {offsets = [0, 0], sizes = [8, 256], strides = [1, 1]} : vector<8x384xf32> to vector<8x256xf32>
    %9 = vector.extract_strided_slice %7 {offsets = [0, 256], sizes = [8, 128], strides = [1, 1]} : vector<8x384xf32> to vector<8x128xf32>
    %10 = arith.truncf %9 : vector<8x128xf32> to vector<8x128xbf16>
    %c0_6 = arith.constant 0 : index
    %c0_7 = arith.constant 0 : index
    %11 = vector.load %arg7[%c0_6, %c0_7] : memref<128x128xbf16, #tpu.memory_space<vmem>>, vector<128x128xbf16>
    %cst_8 = arith.constant dense<0.000000e+00> : vector<8x128xf32>
    %12 = tpu.matmul %10, %11, %cst_8 {dimension_numbers = #tpu.dot_dimension_numbers<[1], [0], [0], [1], [0, 0, 1, 1], [], []>} : vector<8x128xbf16>, vector<128x128xbf16>, vector<8x128xf32> -> vector<8x128xf32>
    %13 = arith.truncf %8 : vector<8x256xf32> to vector<8x256xbf16>
    %c0_9 = arith.constant 0 : index
    %c0_10 = arith.constant 0 : index
    %14 = vector.load %arg4[%c0_9, %c0_10] : memref<256x128xbf16, #tpu.memory_space<vmem>>, vector<256x128xbf16>
    %cst_11 = arith.constant dense<0.000000e+00> : vector<8x128xf32>
    %15 = tpu.matmul %13, %14, %cst_11 {dimension_numbers = #tpu.dot_dimension_numbers<[1], [0], [0], [1], [0, 0, 1, 1], [], []>} : vector<8x256xbf16>, vector<256x128xbf16>, vector<8x128xf32> -> vector<8x128xf32>
    %c0_12 = arith.constant 0 : index
    %c0_13 = arith.constant 0 : index
    %16 = vector.load %arg5[%c0_12, %c0_13] : memref<1x128xf32, #tpu.memory_space<vmem>>, vector<1x128xf32>
    %17 = vector.broadcast %16 : vector<1x128xf32> to vector<8x128xf32>
    %18 = arith.addf %15, %17 : vector<8x128xf32>
    %cst_14 = arith.constant 0.000000e+00 : f32
    %19 = vector.broadcast %cst_14 : f32 to vector<8x128xf32>
    %20 = arith.maximumf %18, %19 : vector<8x128xf32>
    %21 = arith.truncf %20 : vector<8x128xf32> to vector<8x128xbf16>
    %c0_15 = arith.constant 0 : index
    %c0_16 = arith.constant 0 : index
    %22 = vector.load %arg6[%c0_15, %c0_16] : memref<128x128xbf16, #tpu.memory_space<vmem>>, vector<128x128xbf16>
    %cst_17 = arith.constant dense<0.000000e+00> : vector<8x128xf32>
    %23 = tpu.matmul %21, %22, %cst_17 {dimension_numbers = #tpu.dot_dimension_numbers<[1], [0], [0], [1], [0, 0, 1, 1], [], []>} : vector<8x128xbf16>, vector<128x128xbf16>, vector<8x128xf32> -> vector<8x128xf32>
    %24 = arith.addf %23, %12 : vector<8x128xf32>
    %c0_18 = arith.constant 0 : index
    %c0_19 = arith.constant 0 : index
    %25 = vector.load %arg8[%c0_18, %c0_19] : memref<1x128xf32, #tpu.memory_space<vmem>>, vector<1x128xf32>
    %26 = vector.broadcast %25 : vector<1x128xf32> to vector<8x128xf32>
    %27 = arith.addf %24, %26 : vector<8x128xf32>
    %cst_20 = arith.constant 0.000000e+00 : f32
    %28 = vector.broadcast %cst_20 : f32 to vector<8x128xf32>
    %29 = arith.maximumf %27, %28 : vector<8x128xf32>
    %c0_21 = arith.constant 0 : index
    %c0_22 = arith.constant 0 : index
    %30 = vector.load %arg9[%c0_21, %c0_22] : memref<1x128xf32, #tpu.memory_space<vmem>>, vector<1x128xf32>
    %31 = vector.broadcast %30 : vector<1x128xf32> to vector<8x128xf32>
    %32 = arith.mulf %29, %31 : vector<8x128xf32>
    %cst_23 = arith.constant dense<0.000000e+00> : vector<8xf32>
    %33 = vector.multi_reduction <add>, %32, %cst_23 [1] : vector<8x128xf32> to vector<8xf32>
    %c0_24 = arith.constant 0 : index
    %c0_25 = arith.constant 0 : index
    %34 = memref.load %arg10[%c0_24, %c0_25] : memref<1x1xf32, #tpu.memory_space<smem>>
    %35 = vector.broadcast %34 : f32 to vector<8xf32>
    %36 = arith.addf %33, %35 : vector<8xf32>
    %c0_26 = arith.constant 0 : index
    %c0_27 = arith.constant 0 : index
    %c0_28 = arith.constant 0 : index
    %37 = vector.load %arg11[%c0_26, %c0_27, %c0_28] : memref<1x1x8xf32, #tpu.memory_space<vmem>>, vector<1x1x8xf32>
    %38 = vector.shape_cast %37 : vector<1x1x8xf32> to vector<8xf32>
    %39 = vector.shape_cast %36 : vector<8xf32> to vector<1x1x8xf32>
    tpu.vector_store %arg11[%c0_26, %c0_27, %c0_28], %39 {strides = array<i32>} : memref<1x1x8xf32, #tpu.memory_space<vmem>>, vector<1x1x8xf32>,
    return
  }
  func.func @transform_0(%arg0: i32) -> (i32, i32) {
    %c0_i32 = arith.constant 0 : i32
    %c0_i32_0 = arith.constant 0 : i32
    return %arg0, %c0_i32 : i32, i32
  }
  func.func @transform_1(%arg0: i32) -> (i32, i32) {
    %c0_i32 = arith.constant 0 : i32
    %c0_i32_0 = arith.constant 0 : i32
    %c0_i32_1 = arith.constant 0 : i32
    return %c0_i32, %c0_i32_0 : i32, i32
  }
  func.func @transform_2(%arg0: i32) -> (i32, i32) {
    %c0_i32 = arith.constant 0 : i32
    %c0_i32_0 = arith.constant 0 : i32
    %c0_i32_1 = arith.constant 0 : i32
    return %c0_i32, %c0_i32_0 : i32, i32
  }
  func.func @transform_3(%arg0: i32) -> (i32, i32) {
    %c0_i32 = arith.constant 0 : i32
    %c0_i32_0 = arith.constant 0 : i32
    %c0_i32_1 = arith.constant 0 : i32
    return %c0_i32, %c0_i32_0 : i32, i32
  }
  func.func @transform_4(%arg0: i32) -> (i32, i32) {
    %c0_i32 = arith.constant 0 : i32
    %c0_i32_0 = arith.constant 0 : i32
    %c0_i32_1 = arith.constant 0 : i32
    return %c0_i32, %c0_i32_0 : i32, i32
  }
  func.func @transform_5(%arg0: i32) -> (i32, i32) {
    %c0_i32 = arith.constant 0 : i32
    %c0_i32_0 = arith.constant 0 : i32
    %c0_i32_1 = arith.constant 0 : i32
    return %c0_i32, %c0_i32_0 : i32, i32
  }
  func.func @transform_6(%arg0: i32) -> (i32, i32) {
    %c0_i32 = arith.constant 0 : i32
    %c0_i32_0 = arith.constant 0 : i32
    %c0_i32_1 = arith.constant 0 : i32
    return %c0_i32, %c0_i32_0 : i32, i32
  }
  func.func @transform_7(%arg0: i32) -> (i32, i32) {
    %c0_i32 = arith.constant 0 : i32
    %c0_i32_0 = arith.constant 0 : i32
    %c0_i32_1 = arith.constant 0 : i32
    return %c0_i32, %c0_i32_0 : i32, i32
  }
  func.func @transform_8(%arg0: i32) -> (i32, i32) {
    %c0_i32 = arith.constant 0 : i32
    %c0_i32_0 = arith.constant 0 : i32
    %c0_i32_1 = arith.constant 0 : i32
    return %c0_i32, %c0_i32_0 : i32, i32
  }
  func.func @transform_9(%arg0: i32) -> (i32, i32) {
    %c0_i32 = arith.constant 0 : i32
    %c0_i32_0 = arith.constant 0 : i32
    %c0_i32_1 = arith.constant 0 : i32
    return %c0_i32, %c0_i32_0 : i32, i32
  }
  func.func @transform_10(%arg0: i32) -> (i32, i32, i32) {
    %c0_i32 = arith.constant 0 : i32
    %c0_i32_0 = arith.constant 0 : i32
    %c0_i32_1 = arith.constant 0 : i32
    return %arg0, %c0_i32, %c0_i32_0 : i32, i32, i32
  }
}

</mosaic_0001>

<llo_original>
// kernel: critic_forward.1
$region0: #{critic_forward.1}
  #allocation0 [shape = 'u32[]', space=smem, size = 0x4, offset = 0x4, fixed_abs, tag = 'smem constant byte address 0x4 - core index']
  #allocation1 [shape = 'u32[144,128]{1,0:T(1,128)}', space=vmem, size = 0x12000, scoped, tag = 'internal scratch']
  #allocation2 [shape = 'f32[1,1]{1,0:T(1,128)S(6)}', space=smem, size = 0x200, scoped, tag = 'scoped memory for critic_forward.1']
  %s0 = inlined_call_operand.vmem [shape: bf16[8,40], index: 0, kind: input, shape index: {}]
  %s1 = inlined_call_operand.hbm [shape: bf16[40,384], index: 1, kind: input, shape index: {}]
  %s2 = inlined_call_operand.vmem [shape: f32[1,384], index: 2, kind: input, shape index: {}]
  %s3 = inlined_call_operand.hbm [shape: bf16[256,128], index: 3, kind: input, shape index: {}]
  %s4 = inlined_call_operand.vmem [shape: f32[1,128], index: 4, kind: input, shape index: {}]
  %s5 = inlined_call_operand.hbm [shape: bf16[128,128], index: 5, kind: input, shape index: {}]
  %s6 = inlined_call_operand.hbm [shape: bf16[128,128], index: 6, kind: input, shape index: {}]
  %s7 = inlined_call_operand.vmem [shape: f32[1,128], index: 7, kind: input, shape index: {}]
  %s8 = inlined_call_operand.vmem [shape: f32[1,128], index: 8, kind: input, shape index: {}]
  %s9 = inlined_call_operand.<no memory space> [shape: f32[1,1], index: 9, kind: input, shape index: {}]
  %s10 = inlined_call_operand.hbm [shape: f32[1,1,8], index: 10, kind: output, shape index: {}]
  %s11 = sld [smem:[#allocation0]]
  $region66: #{critic_forward.1} parent=0
    _
  %s13 = ssub.s32 1, %s11
  %s14 = scalar_select 0, %s13, %s11
  %15 = sst [smem:[#allocation2]] %s9
  $region1: #{critic_forward.1} parent=0
    #allocation3 [shape = 'u8[30720]{0}', space=vmem, size = 0x7800, scoped, tag = 'input window, operand 1, single buffered']
    #allocation4 [shape = 's32[1]{0}', space=sflag, size = 0x4, scoped, tag = 'scoped memory for critic_forward.1']
    #allocation5 [shape = 's32[1]{0}', space=sflag, size = 0x4, scoped, tag = 'scoped memory for critic_forward.1']
    #allocation6 [shape = 'u8[65536]{0}', space=vmem, size = 0x10000, scoped, tag = 'input window, operand 3, single buffered']
    #allocation7 [shape = 's32[1]{0}', space=sflag, size = 0x4, scoped, tag = 'scoped memory for critic_forward.1']
    #allocation8 [shape = 'u8[32768]{0}', space=vmem, size = 0x8000, scoped, tag = 'input window, operand 5, single buffered']
    #allocation9 [shape = 'u8[32768]{0}', space=vmem, size = 0x8000, scoped, tag = 'input window, operand 6, single buffered']
    #allocation10 [shape = 's32[1]{0}', space=sflag, size = 0x4, scoped, tag = 'scoped memory for critic_forward.1']
    #allocation11 [shape = 'u8[512]{0}', space=vmem, size = 0x400, scoped, tag = 'output window, operand 0, single buffered']
    %16 = vsyncpa [#allocation4], 0
    %17 = vsyncpa [#allocation7], 0
    %18 = vsyncpa [#allocation10], 0
    %19 = vsyncpa [#allocation5], 0
    // Predicated region
    $region2: #{critic_forward.1} parent=1 // pred_check
      _
    $region3: #{critic_forward.1} parent=1 // pred_check_branch
      %21 = sbr.rel (0) target = $region5
    $region4: #{critic_forward.1} parent=1 // pred_region
      _
    $region5: #{critic_forward.1} parent=1 // pred_fallthru
      _
    // Predicated region
    $region6: #{critic_forward.1} parent=1 // pred_check
      _
    $region7: #{critic_forward.1} parent=1 // pred_check_branch
      %23 = sbr.rel (0) target = $region9
    $region8: #{critic_forward.1} parent=1 // pred_region
      %s25 = ssub.s32 960, 960
      %26 = vsyncadd [#allocation4], %s25
      %s27 = sshll.u32 [#allocation3], 4
      %s28 = int_to_ptr.vmem [resolvable:$true] %s27
      %33 = dma.hbm_to_vmem [thread:$0]  %s1, 960, %s28, [#allocation4], 192, 192, 12
    $region9: #{critic_forward.1} parent=1 // pred_fallthru
      _
    // Predicated region
    $region10: #{critic_forward.1} parent=1 // pred_check
      _
    $region11: #{critic_forward.1} parent=1 // pred_check_branch
      %35 = sbr.rel (0) target = $region13
    $region12: #{critic_forward.1} parent=1 // pred_region
      _
    $region13: #{critic_forward.1} parent=1 // pred_fallthru
      _
    // Predicated region
    $region14: #{critic_forward.1} parent=1 // pred_check
      _
    $region15: #{critic_forward.1} parent=1 // pred_check_branch
      %37 = sbr.rel (0) target = $region17
    $region16: #{critic_forward.1} parent=1 // pred_region
      %s39 = ssub.s32 2048, 2048
      %40 = vsyncadd [#allocation7], %s39
      %s41 = sshll.u32 [#allocation6], 4
      %s42 = int_to_ptr.vmem [resolvable:$true] %s41
      %47 = dma.hbm_to_vmem [thread:$0]  %s3, 2048, %s42, [#allocation7], 64, 64, 4
    $region17: #{critic_forward.1} parent=1 // pred_fallthru
      _
    // Predicated region
    $region18: #{critic_forward.1} parent=1 // pred_check
      _
    $region19: #{critic_forward.1} parent=1 // pred_check_branch
      %49 = sbr.rel (0) target = $region21
    $region20: #{critic_forward.1} parent=1 // pred_region
      _
    $region21: #{critic_forward.1} parent=1 // pred_fallthru
      _
    // Predicated region
    $region22: #{critic_forward.1} parent=1 // pred_check
      _
    $region23: #{critic_forward.1} parent=1 // pred_check_branch
      %51 = sbr.rel (0) target = $region25
    $region24: #{critic_forward.1} parent=1 // pred_region
      %s53 = ssub.s32 1024, 1024
      %54 = vsyncadd [#allocation7], %s53
      %s55 = sshll.u32 [#allocation8], 4
      %s56 = int_to_ptr.vmem [resolvable:$true] %s55
      %61 = dma.hbm_to_vmem [thread:$0]  %s5, 1024, %s56, [#allocation7], 64, 64, 4
    $region25: #{critic_forward.1} parent=1 // pred_fallthru
      _
    // Predicated region
    $region26: #{critic_forward.1} parent=1 // pred_check
      _
    $region27: #{critic_forward.1} parent=1 // pred_check_branch
      %63 = sbr.rel (0) target = $region29
    $region28: #{critic_forward.1} parent=1 // pred_region
      %s65 = ssub.s32 1024, 1024
      %66 = vsyncadd [#allocation10], %s65
      %s67 = sshll.u32 [#allocation9], 4
      %s68 = int_to_ptr.vmem [resolvable:$true] %s67
      %73 = dma.hbm_to_vmem [thread:$0]  %s6, 1024, %s68, [#allocation10], 64, 64, 4
    $region29: #{critic_forward.1} parent=1 // pred_fallthru
      _
    // Predicated region
    $region30: #{critic_forward.1} parent=1 // pred_check
      _
    $region31: #{critic_forward.1} parent=1 // pred_check_branch
      %75 = sbr.rel (0) target = $region33
    $region32: #{critic_forward.1} parent=1 // pred_region
      _
    $region33: #{critic_forward.1} parent=1 // pred_fallthru
      _
    // Predicated region
    $region34: #{critic_forward.1} parent=1 // pred_check
      _
    $region35: #{critic_forward.1} parent=1 // pred_check_branch
      %77 = sbr.rel (0) target = $region37
    $region36: #{critic_forward.1} parent=1 // pred_region
      _
    $region37: #{critic_forward.1} parent=1 // pred_fallthru
      _
    // Predicated region
    $region38: #{critic_forward.1} parent=1 // pred_check
      _
    $region39: #{critic_forward.1} parent=1 // pred_check_branch
      %79 = sbr.rel (0) target = $region41
    $region40: #{critic_forward.1} parent=1 // pred_region
      _
    $region41: #{critic_forward.1} parent=1 // pred_fallthru
      _
    // Predicated region
    $region42: #{critic_forward.1} parent=1 // pred_check
      _
    $region43: #{critic_forward.1} parent=1 // pred_check_branch
      %81 = sbr.rel (0) target = $region45
    $region44: #{critic_forward.1} parent=1 // pred_region
      %82 = dma.done [#allocation4], 960
    $region45: #{critic_forward.1} parent=1 // pred_fallthru
      _
    // Predicated region
    $region46: #{critic_forward.1} parent=1 // pred_check
      _
    $region47: #{critic_forward.1} parent=1 // pred_check_branch
      %84 = sbr.rel (0) target = $region49
    $region48: #{critic_forward.1} parent=1 // pred_region
      %85 = dma.done [#allocation7], 2048
    $region49: #{critic_forward.1} parent=1 // pred_fallthru
      _
    // Predicated region
    $region50: #{critic_forward.1} parent=1 // pred_check
      _
    $region51: #{critic_forward.1} parent=1 // pred_check_branch
      %87 = sbr.rel (0) target = $region53
    $region52: #{critic_forward.1} parent=1 // pred_region
      %88 = dma.done [#allocation7], 1024
    $region53: #{critic_forward.1} parent=1 // pred_fallthru
      _
    // Predicated region
    $region54: #{critic_forward.1} parent=1 // pred_check
      _
    $region55: #{critic_forward.1} parent=1 // pred_check_branch
      %90 = sbr.rel (0) target = $region57
    $region56: #{critic_forward.1} parent=1 // pred_region
      %91 = dma.done [#allocation10], 1024
    $region57: #{critic_forward.1} parent=1 // pred_fallthru
      _
    %v93 = vld [vmem:[%s0] sm:$0xf]
    %v94 = vld [vmem:[#allocation3] sm:$0xff]
    %v95 = vld [vmem:[#allocation3 + $0x8] sm:$0xf]
    %v96 = vld [vmem:[#allocation3 + $0xc] sm:$0xff]
    %v97 = vld [vmem:[#allocation3 + $0x14] sm:$0xf]
    %v98 = vld [vmem:[#allocation3 + $0x18] sm:$0xff]
    %v99 = vld [vmem:[#allocation3 + $0x20] sm:$0xf]
    %v100 = vld [vmem:[#allocation3 + $0x24] sm:$0xff]
    %v101 = vld [vmem:[#allocation3 + $0x2c] sm:$0xf]
    %v102 = vld [vmem:[#allocation3 + $0x30] sm:$0xff]
    %v103 = vld [vmem:[#allocation3 + $0x38] sm:$0xf]
    %v104 = vld [vmem:[%s2] sm:$0x7]
    %v106 = vlaneseq
    %v107 = vshrl.u32 %v106, 7
    %v108 = vsub.s32 0, %v107
    %v109 = vrot.slane %v104, %v108
    %v110 = vlaneseq
    %v111 = vshrl.u32 %v110, 7
    %v112 = vsub.s32 1, %v111
    %v113 = vrot.slane %v104, %v112
    %v114 = vlaneseq
    %v115 = vshrl.u32 %v114, 7
    %v116 = vsub.s32 2, %v115
    %v117 = vrot.slane %v104, %v116
    %v131 = vunpack.c.l.b16 %v94
    %v132 = vunpack.c.h.b16 %v94
    %v133 = vunpack.c.l.b16 %v95
    %v134 = vunpack.c.l.b16 %v96
    %v135 = vunpack.c.h.b16 %v96
    %v136 = vunpack.c.l.b16 %v97
    %v137 = vunpack.c.l.b16 %v98
    %v138 = vunpack.c.h.b16 %v98
    %v139 = vunpack.c.l.b16 %v99
    %v140 = vunpack.c.l.b16 %v100
    %v141 = vunpack.c.h.b16 %v100
    %v142 = vunpack.c.l.b16 %v101
    %v143 = vunpack.c.l.b16 %v102
    %v144 = vunpack.c.h.b16 %v102
    %v145 = vunpack.c.l.b16 %v103
    %v146 = vpack.c.b16 %v134, %v131
    %v147 = vpack.c.b16 %v135, %v132
    %v148 = vpack.c.b16 %v136, %v133
    %v149 = vpack.c.b16 %v140, %v137
    %v150 = vpack.c.b16 %v141, %v138
    %v151 = vpack.c.b16 %v142, %v139
    %v152 = vpack.c.b16 %v143, %v143
    %v153 = vpack.c.b16 %v144, %v144
    %v154 = vpack.c.b16 %v145, %v145
    %vm161 = vcmask 326656
    %v163 = vsel %vm161, %v93, 0
    %vm165 = vcmask 1043456
    %v167 = vsel %vm165, %v152, 0
    %v170 = vsel %vm165, %v153, 0
    %v173 = vsel %vm165, %v154, 0
    %175 = vmatprep.subr.bf16.mxu0 %v147
    %176 = vmatpush1.bf16.msra.mxu0 %v146
    %177 = vmatprep.subr.bf16.mxu0 %v150
    %178 = vmatpush1.bf16.msra.mxu0 %v149
    %179 = vmatprep.subr.bf16.mxu0 %v170
    %180 = vmatpush1.bf16.msra.mxu0 %v167
    %181 = vmatprep.subr.bf16.mxu0 0
    %182 = vmatpush1.bf16.msra.mxu0 0
    %183 = vmatprep.subr.bf16.mxu0 0
    %184 = vmatpush1.bf16.msra.mxu0 0
    %185 = vmatprep.subr.bf16.mxu0 0
    %186 = vmatpush1.bf16.msra.mxu0 0
    %187 = vmatprep.subr.bf16.mxu0 0
    %188 = vmatpush1.bf16.msra.mxu0 0
    %189 = vmatprep.subr.bf16.mxu0 0
    %190 = vmatpush1.bf16.msra.mxu0 0
    %191 = vmatprep.subr.bf16.mxu0 0
    %192 = vmatpush1.bf16.msra.mxu0 0
    %193 = vmatprep.subr.bf16.mxu0 0
    %194 = vmatpush1.bf16.msra.mxu0 0
    %195 = vmatprep.subr.bf16.mxu0 0
    %196 = vmatpush1.bf16.msra.mxu0 0
    %197 = vmatprep.subr.bf16.mxu0 0
    %198 = vmatpush1.bf16.msra.mxu0 0
    %199 = vmatprep.subr.bf16.mxu0 0
    %200 = vmatpush1.bf16.msra.mxu0 0
    %201 = vmatprep.subr.bf16.mxu0 0
    %202 = vmatpush1.bf16.msra.mxu0 0
    %203 = vmatprep.subr.bf16.mxu0 0
    %204 = vmatpush1.bf16.msra.mxu0 0
    %205 = vmatprep.subr.bf16.mxu0 0
    %206 = vmatpush1.bf16.msra.mxu0 0
    %207 = vmatprep.mubr.bf16.mxu0 0
    %208 = vmatmul.mubr.bf16.gmra.mrb[0].mxu0 %v163
    %v209 = vpop.f32.mrb[0].mxu0
    %v210 = vadd.f32 %v109, %v209
    %v211 = vpop.f32.mrb[0].mxu0
    %v212 = vadd.f32 %v113, %v211
    %v213 = vpop.f32.mrb[0].mxu0
    %v214 = vpop.f32.mrb[0].mxu0
    %215 = vdwg.mxu0
    %216 = vmatprep.subr.bf16.mxu0 0
    %217 = vmatpush1.bf16.msra.mxu0 %v148
    %218 = vmatprep.subr.bf16.mxu0 0
    %219 = vmatpush1.bf16.msra.mxu0 %v151
    %220 = vmatprep.subr.bf16.mxu0 0
    %221 = vmatpush1.bf16.msra.mxu0 %v173
    %222 = vmatprep.subr.bf16.mxu0 0
    %223 = vmatpush1.bf16.msra.mxu0 0
    %224 = vmatprep.subr.bf16.mxu0 0
    %225 = vmatpush1.bf16.msra.mxu0 0
    %226 = vmatprep.subr.bf16.mxu0 0
    %227 = vmatpush1.bf16.msra.mxu0 0
    %228 = vmatprep.subr.bf16.mxu0 0
    %229 = vmatpush1.bf16.msra.mxu0 0
    %230 = vmatprep.subr.bf16.mxu0 0
    %231 = vmatpush1.bf16.msra.mxu0 0
    %232 = vmatprep.subr.bf16.mxu0 0
    %233 = vmatpush1.bf16.msra.mxu0 0
    %234 = vmatprep.subr.bf16.mxu0 0
    %235 = vmatpush1.bf16.msra.mxu0 0
    %236 = vmatprep.subr.bf16.mxu0 0
    %237 = vmatpush1.bf16.msra.mxu0 0
    %238 = vmatprep.subr.bf16.mxu0 0
    %239 = vmatpush1.bf16.msra.mxu0 0
    %240 = vmatprep.subr.bf16.mxu0 0
    %241 = vmatpush1.bf16.msra.mxu0 0
    %242 = vmatprep.subr.bf16.mxu0 0
    %243 = vmatpush1.bf16.msra.mxu0 0
    %244 = vmatprep.subr.bf16.mxu0 0
    %245 = vmatpush1.bf16.msra.mxu0 0
    %246 = vmatprep.subr.bf16.mxu0 0
    %247 = vmatpush1.bf16.msra.mxu0 0
    %248 = vmatprep.mubr.bf16.mxu0 0
    %249 = vmatmul.mubr.bf16.gmra.mrb[0].mxu0 %v163
    %v250 = vpop.f32.mrb[0].mxu0
    %v251 = vadd.f32 %v117, %v250
    %v252 = vpop.f32.mrb[0].mxu0
    %v253 = vpop.f32.mrb[0].mxu0
    %v254 = vpop.f32.mrb[0].mxu0
    %255 = vdwg.mxu0
    %v256 = vmax.f32 %v210, 0.0
    %v257 = vmax.f32 %v212, 0.0
    %v258 = vmax.f32 %v251, 0.0
    %v259 = vpack.c.bf16 %v258, %v258
    %v260 = vld [vmem:[#allocation9] sm:$0xf]
    %v261 = vld [vmem:[#allocation9 + $0x4] sm:$0xf]
    %v262 = vld [vmem:[#allocation9 + $0x8] sm:$0xf]
    %v263 = vld [vmem:[#allocation9 + $0xc] sm:$0xf]
    %v264 = vld [vmem:[#allocation9 + $0x10] sm:$0xf]
    %v265 = vld [vmem:[#allocation9 + $0x14] sm:$0xf]
    %v266 = vld [vmem:[#allocation9 + $0x18] sm:$0xf]
    %v267 = vld [vmem:[#allocation9 + $0x1c] sm:$0xf]
    %v268 = vld [vmem:[#allocation9 + $0x20] sm:$0xf]
    %v269 = vld [vmem:[#allocation9 + $0x24] sm:$0xf]
    %v270 = vld [vmem:[#allocation9 + $0x28] sm:$0xf]
    %v271 = vld [vmem:[#allocation9 + $0x2c] sm:$0xf]
    %v272 = vld [vmem:[#allocation9 + $0x30] sm:$0xf]
    %v273 = vld [vmem:[#allocation9 + $0x34] sm:$0xf]
    %v274 = vld [vmem:[#allocation9 + $0x38] sm:$0xf]
    %v275 = vld [vmem:[#allocation9 + $0x3c] sm:$0xf]
    %v292 = vunpack.c.l.b16 %v260
    %v293 = vunpack.c.l.b16 %v261
    %v294 = vunpack.c.l.b16 %v262
    %v295 = vunpack.c.l.b16 %v263
    %v296 = vunpack.c.l.b16 %v264
    %v297 = vunpack.c.l.b16 %v265
    %v298 = vunpack.c.l.b16 %v266
    %v299 = vunpack.c.l.b16 %v267
    %v300 = vunpack.c.l.b16 %v268
    %v301 = vunpack.c.l.b16 %v269
    %v302 = vunpack.c.l.b16 %v270
    %v303 = vunpack.c.l.b16 %v271
    %v304 = vunpack.c.l.b16 %v272
    %v305 = vunpack.c.l.b16 %v273
    %v306 = vunpack.c.l.b16 %v274
    %v307 = vunpack.c.l.b16 %v275
    %v308 = vpack.c.b16 %v293, %v292
    %v309 = vpack.c.b16 %v295, %v294
    %v310 = vpack.c.b16 %v297, %v296
    %v311 = vpack.c.b16 %v299, %v298
    %v312 = vpack.c.b16 %v301, %v300
    %v313 = vpack.c.b16 %v303, %v302
    %v314 = vpack.c.b16 %v305, %v304
    %v315 = vpack.c.b16 %v307, %v306
    %324 = vmatprep.subr.bf16.mxu0 0
    %325 = vmatpush1.bf16.msra.mxu0 %v308
    %326 = vmatprep.subr.bf16.mxu0 0
    %327 = vmatpush1.bf16.msra.mxu0 %v309
    %328 = vmatprep.subr.bf16.mxu0 0
    %329 = vmatpush1.bf16.msra.mxu0 %v310
    %330 = vmatprep.subr.bf16.mxu0 0
    %331 = vmatpush1.bf16.msra.mxu0 %v311
    %332 = vmatprep.subr.bf16.mxu0 0
    %333 = vmatpush1.bf16.msra.mxu0 %v312
    %334 = vmatprep.subr.bf16.mxu0 0
    %335 = vmatpush1.bf16.msra.mxu0 %v313
    %336 = vmatprep.subr.bf16.mxu0 0
    %337 = vmatpush1.bf16.msra.mxu0 %v314
    %338 = vmatprep.subr.bf16.mxu0 0
    %339 = vmatpush1.bf16.msra.mxu0 %v315
    %340 = vmatprep.subr.bf16.mxu0 0
    %341 = vmatpush1.bf16.msra.mxu0 0
    %342 = vmatprep.subr.bf16.mxu0 0
    %343 = vmatpush1.bf16.msra.mxu0 0
    %344 = vmatprep.subr.bf16.mxu0 0
    %345 = vmatpush1.bf16.msra.mxu0 0
    %346 = vmatprep.subr.bf16.mxu0 0
    %347 = vmatpush1.bf16.msra.mxu0 0
    %348 = vmatprep.subr.bf16.mxu0 0
    %349 = vmatpush1.bf16.msra.mxu0 0
    %350 = vmatprep.subr.bf16.mxu0 0
    %351 = vmatpush1.bf16.msra.mxu0 0
    %352 = vmatprep.subr.bf16.mxu0 0
    %353 = vmatpush1.bf16.msra.mxu0 0
    %354 = vmatprep.subr.bf16.mxu0 0
    %355 = vmatpush1.bf16.msra.mxu0 0
    %356 = vmatprep.mubr.bf16.mxu0 0
    %357 = vmatmul.mubr.bf16.gmra.mrb[0].mxu0 %v259
    %v358 = vpop.f32.mrb[0].mxu0
    %v359 = vadd.f32 0.0, %v358
    %v360 = vpop.f32.mrb[0].mxu0
    %v361 = vpop.f32.mrb[0].mxu0
    %v362 = vpop.f32.mrb[0].mxu0
    %363 = vdwg.mxu0
    %v364 = vpack.c.bf16 %v256, %v256
    %v365 = vpack.c.bf16 %v257, %v257
    %v366 = vld [vmem:[#allocation6] sm:$0xf]
    %v367 = vld [vmem:[#allocation6 + $0x4] sm:$0xf]
    %v368 = vld [vmem:[#allocation6 + $0x8] sm:$0xf]
    %v369 = vld [vmem:[#allocation6 + $0xc] sm:$0xf]
    %v370 = vld [vmem:[#allocation6 + $0x10] sm:$0xf]
    %v371 = vld [vmem:[#allocation6 + $0x14] sm:$0xf]
    %v372 = vld [vmem:[#allocation6 + $0x18] sm:$0xf]
    %v373 = vld [vmem:[#allocation6 + $0x1c] sm:$0xf]
    %v374 = vld [vmem:[#allocation6 + $0x20] sm:$0xf]
    %v375 = vld [vmem:[#allocation6 + $0x24] sm:$0xf]
    %v376 = vld [vmem:[#allocation6 + $0x28] sm:$0xf]
    %v377 = vld [vmem:[#allocation6 + $0x2c] sm:$0xf]
    %v378 = vld [vmem:[#allocation6 + $0x30] sm:$0xf]
    %v379 = vld [vmem:[#allocation6 + $0x34] sm:$0xf]
    %v380 = vld [vmem:[#allocation6 + $0x38] sm:$0xf]
    %v381 = vld [vmem:[#allocation6 + $0x3c] sm:$0xf]
    %v382 = vld [vmem:[#allocation6 + $0x40] sm:$0xf]
    %v383 = vld [vmem:[#allocation6 + $0x44] sm:$0xf]
    %v384 = vld [vmem:[#allocation6 + $0x48] sm:$0xf]
    %v385 = vld [vmem:[#allocation6 + $0x4c] sm:$0xf]
    %v386 = vld [vmem:[#allocation6 + $0x50] sm:$0xf]
    %v387 = vld [vmem:[#allocation6 + $0x54] sm:$0xf]
    %v388 = vld [vmem:[#allocation6 + $0x58] sm:$0xf]
    %v389 = vld [vmem:[#allocation6 + $0x5c] sm:$0xf]
    %v390 = vld [vmem:[#allocation6 + $0x60] sm:$0xf]
    %v391 = vld [vmem:[#allocation6 + $0x64] sm:$0xf]
    %v392 = vld [vmem:[#allocation6 + $0x68] sm:$0xf]
    %v393 = vld [vmem:[#allocation6 + $0x6c] sm:$0xf]
    %v394 = vld [vmem:[#allocation6 + $0x70] sm:$0xf]
    %v395 = vld [vmem:[#allocation6 + $0x74] sm:$0xf]
    %v396 = vld [vmem:[#allocation6 + $0x78] sm:$0xf]
    %v397 = vld [vmem:[#allocation6 + $0x7c] sm:$0xf]
    %v398 = vld [vmem:[%s4] sm:$0x1]
    %v400 = vlaneseq
    %v401 = vshrl.u32 %v400, 7
    %v402 = vsub.s32 0, %v401
    %v403 = vrot.slane %v398, %v402
    %v437 = vunpack.c.l.b16 %v366
    %v438 = vunpack.c.l.b16 %v367
    %v439 = vunpack.c.l.b16 %v368
    %v440 = vunpack.c.l.b16 %v369
    %v441 = vunpack.c.l.b16 %v370
    %v442 = vunpack.c.l.b16 %v371
    %v443 = vunpack.c.l.b16 %v372
    %v444 = vunpack.c.l.b16 %v373
    %v445 = vunpack.c.l.b16 %v374
    %v446 = vunpack.c.l.b16 %v375
    %v447 = vunpack.c.l.b16 %v376
    %v448 = vunpack.c.l.b16 %v377
    %v449 = vunpack.c.l.b16 %v378
    %v450 = vunpack.c.l.b16 %v379
    %v451 = vunpack.c.l.b16 %v380
    %v452 = vunpack.c.l.b16 %v381
    %v453 = vunpack.c.l.b16 %v382
    %v454 = vunpack.c.l.b16 %v383
    %v455 = vunpack.c.l.b16 %v384
    %v456 = vunpack.c.l.b16 %v385
    %v457 = vunpack.c.l.b16 %v386
    %v458 = vunpack.c.l.b16 %v387
    %v459 = vunpack.c.l.b16 %v388
    %v460 = vunpack.c.l.b16 %v389
    %v461 = vunpack.c.l.b16 %v390
    %v462 = vunpack.c.l.b16 %v391
    %v463 = vunpack.c.l.b16 %v392
    %v464 = vunpack.c.l.b16 %v393
    %v465 = vunpack.c.l.b16 %v394
    %v466 = vunpack.c.l.b16 %v395
    %v467 = vunpack.c.l.b16 %v396
    %v468 = vunpack.c.l.b16 %v397
    %v469 = vpack.c.b16 %v438, %v437
    %v470 = vpack.c.b16 %v440, %v439
    %v471 = vpack.c.b16 %v442, %v441
    %v472 = vpack.c.b16 %v444, %v443
    %v473 = vpack.c.b16 %v446, %v445
    %v474 = vpack.c.b16 %v448, %v447
    %v475 = vpack.c.b16 %v450, %v449
    %v476 = vpack.c.b16 %v452, %v451
    %v477 = vpack.c.b16 %v454, %v453
    %v478 = vpack.c.b16 %v456, %v455
    %v479 = vpack.c.b16 %v458, %v457
    %v480 = vpack.c.b16 %v460, %v459
    %v481 = vpack.c.b16 %v462, %v461
    %v482 = vpack.c.b16 %v464, %v463
    %v483 = vpack.c.b16 %v466, %v465
    %v484 = vpack.c.b16 %v468, %v467
    %501 = vmatprep.subr.bf16.mxu0 0
    %502 = vmatpush1.bf16.msra.mxu0 %v469
    %503 = vmatprep.subr.bf16.mxu0 0
    %504 = vmatpush1.bf16.msra.mxu0 %v470
    %505 = vmatprep.subr.bf16.mxu0 0
    %506 = vmatpush1.bf16.msra.mxu0 %v471
    %507 = vmatprep.subr.bf16.mxu0 0
    %508 = vmatpush1.bf16.msra.mxu0 %v472
    %509 = vmatprep.subr.bf16.mxu0 0
    %510 = vmatpush1.bf16.msra.mxu0 %v473
    %511 = vmatprep.subr.bf16.mxu0 0
    %512 = vmatpush1.bf16.msra.mxu0 %v474
    %513 = vmatprep.subr.bf16.mxu0 0
    %514 = vmatpush1.bf16.msra.mxu0 %v475
    %515 = vmatprep.subr.bf16.mxu0 0
    %516 = vmatpush1.bf16.msra.mxu0 %v476
    %517 = vmatprep.subr.bf16.mxu0 0
    %518 = vmatpush1.bf16.msra.mxu0 %v477
    %519 = vmatprep.subr.bf16.mxu0 0
    %520 = vmatpush1.bf16.msra.mxu0 %v478
    %521 = vmatprep.subr.bf16.mxu0 0
    %522 = vmatpush1.bf16.msra.mxu0 %v479
    %523 = vmatprep.subr.bf16.mxu0 0
    %524 = vmatpush1.bf16.msra.mxu0 %v480
    %525 = vmatprep.subr.bf16.mxu0 0
    %526 = vmatpush1.bf16.msra.mxu0 %v481
    %527 = vmatprep.subr.bf16.mxu0 0
    %528 = vmatpush1.bf16.msra.mxu0 %v482
    %529 = vmatprep.subr.bf16.mxu0 0
    %530 = vmatpush1.bf16.msra.mxu0 %v483
    %531 = vmatprep.subr.bf16.mxu0 0
    %532 = vmatpush1.bf16.msra.mxu0 %v484
    %533 = vmatprep.mubr.bf16.mxu0 %v365
    %534 = vmatmul.mubr.bf16.gmra.mrb[0].mxu0 %v364
    %v535 = vpop.f32.mrb[0].mxu0
    %v536 = vadd.f32 %v403, %v535
    %v537 = vpop.f32.mrb[0].mxu0
    %v538 = vpop.f32.mrb[0].mxu0
    %v539 = vpop.f32.mrb[0].mxu0
    %540 = vdwg.mxu0
    %v541 = vmax.f32 %v536, 0.0
    %v542 = vpack.c.bf16 %v541, %v541
    %v543 = vld [vmem:[#allocation8] sm:$0xf]
    %v544 = vld [vmem:[#allocation8 + $0x4] sm:$0xf]
    %v545 = vld [vmem:[#allocation8 + $0x8] sm:$0xf]
    %v546 = vld [vmem:[#allocation8 + $0xc] sm:$0xf]
    %v547 = vld [vmem:[#allocation8 + $0x10] sm:$0xf]
    %v548 = vld [vmem:[#allocation8 + $0x14] sm:$0xf]
    %v549 = vld [vmem:[#allocation8 + $0x18] sm:$0xf]
    %v550 = vld [vmem:[#allocation8 + $0x1c] sm:$0xf]
    %v551 = vld [vmem:[#allocation8 + $0x20] sm:$0xf]
    %v552 = vld [vmem:[#allocation8 + $0x24] sm:$0xf]
    %v553 = vld [vmem:[#allocation8 + $0x28] sm:$0xf]
    %v554 = vld [vmem:[#allocation8 + $0x2c] sm:$0xf]
    %v555 = vld [vmem:[#allocation8 + $0x30] sm:$0xf]
    %v556 = vld [vmem:[#allocation8 + $0x34] sm:$0xf]
    %v557 = vld [vmem:[#allocation8 + $0x38] sm:$0xf]
    %v558 = vld [vmem:[#allocation8 + $0x3c] sm:$0xf]
    %v575 = vunpack.c.l.b16 %v543
    %v576 = vunpack.c.l.b16 %v544
    %v577 = vunpack.c.l.b16 %v545
    %v578 = vunpack.c.l.b16 %v546
    %v579 = vunpack.c.l.b16 %v547
    %v580 = vunpack.c.l.b16 %v548
    %v581 = vunpack.c.l.b16 %v549
    %v582 = vunpack.c.l.b16 %v550
    %v583 = vunpack.c.l.b16 %v551
    %v584 = vunpack.c.l.b16 %v552
    %v585 = vunpack.c.l.b16 %v553
    %v586 = vunpack.c.l.b16 %v554
    %v587 = vunpack.c.l.b16 %v555
    %v588 = vunpack.c.l.b16 %v556
    %v589 = vunpack.c.l.b16 %v557
    %v590 = vunpack.c.l.b16 %v558
    %v591 = vpack.c.b16 %v576, %v575
    %v592 = vpack.c.b16 %v578, %v577
    %v593 = vpack.c.b16 %v580, %v579
    %v594 = vpack.c.b16 %v582, %v581
    %v595 = vpack.c.b16 %v584, %v583
    %v596 = vpack.c.b16 %v586, %v585
    %v597 = vpack.c.b16 %v588, %v587
    %v598 = vpack.c.b16 %v590, %v589
    %607 = vmatprep.subr.bf16.mxu0 0
    %608 = vmatpush1.bf16.msra.mxu0 %v591
    %609 = vmatprep.subr.bf16.mxu0 0
    %610 = vmatpush1.bf16.msra.mxu0 %v592
    %611 = vmatprep.subr.bf16.mxu0 0
    %612 = vmatpush1.bf16.msra.mxu0 %v593
    %613 = vmatprep.subr.bf16.mxu0 0
    %614 = vmatpush1.bf16.msra.mxu0 %v594
    %615 = vmatprep.subr.bf16.mxu0 0
    %616 = vmatpush1.bf16.msra.mxu0 %v595
    %617 = vmatprep.subr.bf16.mxu0 0
    %618 = vmatpush1.bf16.msra.mxu0 %v596
    %619 = vmatprep.subr.bf16.mxu0 0
    %620 = vmatpush1.bf16.msra.mxu0 %v597
    %621 = vmatprep.subr.bf16.mxu0 0
    %622 = vmatpush1.bf16.msra.mxu0 %v598
    %623 = vmatprep.subr.bf16.mxu0 0
    %624 = vmatpush1.bf16.msra.mxu0 0
    %625 = vmatprep.subr.bf16.mxu0 0
    %626 = vmatpush1.bf16.msra.mxu0 0
    %627 = vmatprep.subr.bf16.mxu0 0
    %628 = vmatpush1.bf16.msra.mxu0 0
    %629 = vmatprep.subr.bf16.mxu0 0
    %630 = vmatpush1.bf16.msra.mxu0 0
    %631 = vmatprep.subr.bf16.mxu0 0
    %632 = vmatpush1.bf16.msra.mxu0 0
    %633 = vmatprep.subr.bf16.mxu0 0
    %634 = vmatpush1.bf16.msra.mxu0 0
    %635 = vmatprep.subr.bf16.mxu0 0
    %636 = vmatpush1.bf16.msra.mxu0 0
    %637 = vmatprep.subr.bf16.mxu0 0
    %638 = vmatpush1.bf16.msra.mxu0 0
    %639 = vmatprep.mubr.bf16.mxu0 0
    %640 = vmatmul.mubr.bf16.gmra.mrb[0].mxu0 %v542
    %v641 = vpop.f32.mrb[0].mxu0
    %v642 = vadd.f32 %v359, %v641
    %v643 = vpop.f32.mrb[0].mxu0
    %v644 = vpop.f32.mrb[0].mxu0
    %v645 = vpop.f32.mrb[0].mxu0
    %646 = vdwg.mxu0
    %v647 = vld [vmem:[%s7] sm:$0x1]
    %v649 = vlaneseq
    %v650 = vshrl.u32 %v649, 7
    %v651 = vsub.s32 0, %v650
    %v652 = vrot.slane %v647, %v651
    %v654 = vadd.f32 %v642, %v652
    %v655 = vmax.f32 %v654, 0.0
    %v656 = vld [vmem:[%s8] sm:$0x1]
    %v658 = vlaneseq
    %v659 = vshrl.u32 %v658, 7
    %v660 = vsub.s32 0, %v659
    %v661 = vrot.slane %v656, %v660
    %v663 = vmul.f32 %v655, %v661
    %664 = vadd.xlane.f32.xlu0 %v663
    %v665 = vpop.xlane.xlu0 %664
    %s666 = sld [smem:[#allocation2]]
    %v667 = vstv %s666
    %v668 = vadd.f32 %v665, %v667
    %v670 = vlaneseq
    %v671 = vand.u32 %v670, 127
    %v672 = vlaneseq
    %v673 = vshrl.u32 %v672, 7
    %v674 = vsub.s32 %v671, %v673
    %v675 = vrot.slane %v668, %v674
    %vm677 = vcmask 57344
    %678 = vst.msk [vmem:[#allocation11] sm:$0x1] %vm677, %v675
    // Predicated region
    $region58: #{critic_forward.1} parent=1 // pred_check
      _
    $region59: #{critic_forward.1} parent=1 // pred_check_branch
      %680 = sbr.rel (0) target = $region61
    $region60: #{critic_forward.1} parent=1 // pred_region
      %s682 = ssub.s32 16, 16
      %683 = vsyncadd [#allocation5], %s682
      %s685 = sshll.u32 [#allocation11], 4
      %s686 = int_to_ptr.vmem [resolvable:$true] %s685
      %688 = dma.vmem_to_hbm [thread:$0]  %s686, 16, %s10, [#allocation5]
    $region61: #{critic_forward.1} parent=1 // pred_fallthru
      _
    // Predicated region
    $region62: #{critic_forward.1} parent=1 // pred_check
      _
    $region63: #{critic_forward.1} parent=1 // pred_check_branch
      %690 = sbr.rel (0) target = $region65
    $region64: #{critic_forward.1} parent=1 // pred_region
      %691 = dma.done [#allocation5], 16
    $region65: #{critic_forward.1} parent=1 // pred_fallthru
      _
    %692 = vsyncpa [#allocation4], 1
    %693 = vsyncpa [#allocation7], 1
    %694 = vsyncpa [#allocation10], 1
    %695 = vsyncpa [#allocation5], 1

</llo_original>
